<compile_context>
chip_gen: v6e
topology: v6e:2x2x1
jax: 0.10.0
libtpu: 0.0.40
codegen_flags: <defaults>
</compile_context>

<pallas_src>
import jax
import jax.numpy as jnp
from jax.experimental import pallas as pl
from jax.experimental.pallas import tpu as pltpu


def _qprelu_kernel(x_ref, w_ref, o_ref):
    x = x_ref[...]          # (tm, tn)
    w = w_ref[...]          # (tm, 1) -> broadcasts across the lane axis
    o_ref[...] = jnp.where(x >= 0, x, x * w)


def _tile_sizes(rows, lanes, itemsize,
                target_bytes=4 * 1024 * 1024, min_steps=4):
    """Pick a lane-dense, dtype-aligned (tm, tn) tile of ~target_bytes.

    * tn is a multiple of 128 (unmasked vst) unless the whole lane extent is
      smaller than 128; ragged last blocks rely on cdiv grid + edge masking.
    * tm is a multiple of the dtype packing granule (8 f32 / 16 bf16 / 32 i8)
      unless rows < granule.  No full-extent fallbacks that could blow VMEM.
    * Lane extent grows first (longer contiguous DMA bursts), then tm fills
      the remaining byte budget.
    * Tiles shrink (staying aligned) until the grid has >= min_steps steps so
      v7x's 2 TensorCores both get work; harmless on v5e/v6e.
    """
    granule = max(8, 32 // itemsize)

    # Lane (fast) axis.
    if lanes < 128:
        tn = lanes
    else:
        cap_tn = max(128, (target_bytes // (granule * itemsize)) // 128 * 128)
        tn = min((lanes // 128) * 128, cap_tn)

    # Sublane axis: fill the remaining per-tile byte budget.
    if rows < granule:
        tm = rows
    else:
        tm = (target_bytes // (tn * itemsize)) // granule * granule
        tm = max(granule, min(tm, (rows // granule) * granule))

    def _steps(m, n):
        return pl.cdiv(rows, m) * pl.cdiv(lanes, n)

    # Ensure enough grid steps for megacore sharding (v7x).
    while _steps(tm, tn) < min_steps:
        if tm >= 2 * granule:
            tm = pl.cdiv(tm, 2 * granule) * granule      # ~halve, stay aligned
        elif tn >= 2 * 128:
            tn = pl.cdiv(tn, 2 * 128) * 128
        else:
            break
    return tm, tn


def qprelu(x: jax.Array, weight: jax.Array) -> jax.Array:
    """Quaternion PReLU. x: (B, C, 4, H, W), weight: (4*num_parameters,)."""
    B, C, Q, H, W = x.shape
    assert Q == 4, "quaternion axis must have size 4"
    P = weight.shape[0] // 4
    assert weight.shape[0] == 4 * P

    # Per-(b, c, q) slope, one slope per row of the 2-D view.
    # Note: slope is rounded to x.dtype before the multiply (bf16/fp8 runs).
    w_q = weight.reshape(4, P).astype(x.dtype)                 # [q, p]
    if P == 1:
        w_bcq = jnp.broadcast_to(w_q.reshape(1, 1, 4), (B, C, 4))
    elif P == C:
        w_bcq = jnp.broadcast_to(w_q.T.reshape(1, C, 4), (B, C, 4))
    else:
        raise ValueError("num_parameters must be 1 or equal to C")

    rows = B * C * 4
    lanes = H * W
    itemsize = x.dtype.itemsize
    xf = x.reshape(rows, lanes)                                # lane-dense view
    w_rows = w_bcq.reshape(rows, 1)

    tm, tn = _tile_sizes(rows, lanes, itemsize)
    grid = (pl.cdiv(rows, tm), pl.cdiv(lanes, tn))

    # Memory-bound streaming op: advise XLA of the true cost.
    n_elems = rows * lanes
    cost = pl.CostEstimate(flops=3 * n_elems, transcendentals=0,
                           bytes_accessed=2 * n_elems * itemsize)

    out = pl.pallas_call(
        _qprelu_kernel,
        out_shape=jax.ShapeDtypeStruct((rows, lanes), x.dtype),
        grid_spec=pltpu.PrefetchScalarGridSpec(
            num_scalar_prefetch=0,
            grid=grid,
            in_specs=[
                pl.BlockSpec((tm, tn), lambda i, j: (i, j)),
                # Lane axis j is innermost, so this block index only changes
                # with i -> the slope column is not re-DMA'd across j steps.
                pl.BlockSpec((tm, 1), lambda i, j: (i, 0)),
            ],
            out_specs=pl.BlockSpec((tm, tn), lambda i, j: (i, j)),
        ),
        compiler_params=pltpu.CompilerParams(
            dimension_semantics=("parallel", "parallel"),
            # 2x(in + out) double-buffered 4 MiB tiles ~ 16-17 MiB: above the
            # v5e 16 MiB scoped default, safely under v7x's 64 MiB physical.
            vmem_limit_bytes=32 * 1024 * 1024,
        ),
        cost_estimate=cost,
    )(xf, w_rows)

    return out.reshape(B, C, Q, H, W)


def _ref_qprelu(x, weight):
    B, C, Q, H, W = x.shape
    P = weight.shape[0] // 4
    w_q = weight.reshape(4, P)                                  # [q, p]
    if P == 1:
        w_full = w_q.reshape(1, 1, 4, 1, 1)
    else:
        w_full = w_q.T[None, :, :, None, None]                  # (1, C, 4, 1, 1)
    return jnp.where(x >= 0, x, x * w_full.astype(x.dtype))


if __name__ == "__main__":
    key = jax.random.PRNGKey(0)
    kx, kw, kx2 = jax.random.split(key, 3)

    # --- Test 1: num_parameters = 1 (module default), aligned shape ---------
    B, C, Q, H, W = 2, 4, 4, 16, 16
    x = jax.random.normal(kx, (B, C, Q, H, W), dtype=jnp.float32)
    weight1 = jnp.array([0.25, 0.1, -0.3, 0.5], dtype=jnp.float32)
    y1 = qprelu(x, weight1)
    jax.block_until_ready(y1)
    assert y1.shape == x.shape and y1.dtype == x.dtype
    assert jnp.allclose(y1, _ref_qprelu(x, weight1)), \
        "mismatch vs reference (num_parameters=1)"

    # --- Test 2: num_parameters = C (per-channel slopes), same kernel path --
    weightC = jax.random.uniform(kw, (4 * C,), dtype=jnp.float32,
                                 minval=-0.5, maxval=0.5)
    yC = qprelu(x, weightC)
    jax.block_until_ready(yC)
    assert jnp.allclose(yC, _ref_qprelu(x, weightC)), \
        "mismatch vs reference (num_parameters=C)"

    # --- Test 3: ragged shape (rows % 8 != 0, lanes % 128 != 0) -------------
    # Exercises aligned tiles + cdiv grid + edge masking on both axes.
    xr = jax.random.normal(kx2, (1, 3, 4, 14, 14), dtype=jnp.float32)
    yr = qprelu(xr, weight1)
    jax.block_until_ready(yr)
    assert jnp.allclose(yr, _ref_qprelu(xr, weight1)), \
        "mismatch vs reference (ragged shape)"

    print("KERNEL_OK")
</pallas_src>

<mosaic_0001>
module attributes {stable_mosaic.version = 11 : i64} {
  func.func @_qprelu_kernel(%arg0: i32, %arg1: i32, %arg2: memref<8x256xf32, #tpu.memory_space<vmem>>, %arg3: memref<8x1xf32, #tpu.memory_space<vmem>>, %arg4: memref<8x256xf32, #tpu.memory_space<vmem>>) attributes {dimension_semantics = [#tpu.dimension_semantics<parallel>, #tpu.dimension_semantics<parallel>], iteration_bounds = array<i64: 4, 1>, scalar_prefetch = 0 : i64, scratch_operands = 0 : i64, tpu.core_type = #tpu.core_type<tc>, window_params = [{transform_indices = @transform_0, window_bounds = array<i64: 8, 256>}, {transform_indices = @transform_1, window_bounds = array<i64: 8, 1>}, {transform_indices = @transform_2, window_bounds = array<i64: 8, 256>}]} {
    %c0 = arith.constant 0 : index
    %c0_0 = arith.constant 0 : index
    %0 = vector.load %arg2[%c0, %c0_0] : memref<8x256xf32, #tpu.memory_space<vmem>>, vector<8x256xf32>
    %c0_1 = arith.constant 0 : index
    %c0_2 = arith.constant 0 : index
    %1 = vector.load %arg3[%c0_1, %c0_2] : memref<8x1xf32, #tpu.memory_space<vmem>>, vector<8x1xf32>
    %cst = arith.constant 0.000000e+00 : f32
    %2 = vector.broadcast %cst : f32 to vector<8x256xf32>
    %3 = arith.cmpf oge, %0, %2 : vector<8x256xf32>
    %4 = vector.broadcast %1 : vector<8x1xf32> to vector<8x256xf32>
    %5 = arith.mulf %0, %4 : vector<8x256xf32>
    %6 = arith.select %3, %0, %5 : vector<8x256xi1>, vector<8x256xf32>
    %c0_3 = arith.constant 0 : index
    %c0_4 = arith.constant 0 : index
    %7 = vector.load %arg4[%c0_3, %c0_4] : memref<8x256xf32, #tpu.memory_space<vmem>>, vector<8x256xf32>
    tpu.vector_store %arg4[%c0_3, %c0_4], %6 {strides = array<i32>} : memref<8x256xf32, #tpu.memory_space<vmem>>, vector<8x256xf32>,
    return
  }
  func.func @transform_0(%arg0: i32, %arg1: i32) -> (i32, i32) {
    %c0_i32 = arith.constant 0 : i32
    return %arg0, %arg1 : i32, i32
  }
  func.func @transform_1(%arg0: i32, %arg1: i32) -> (i32, i32) {
    %c0_i32 = arith.constant 0 : i32
    %c0_i32_0 = arith.constant 0 : i32
    return %arg0, %c0_i32 : i32, i32
  }
  func.func @transform_2(%arg0: i32, %arg1: i32) -> (i32, i32) {
    %c0_i32 = arith.constant 0 : i32
    return %arg0, %arg1 : i32, i32
  }
}

</mosaic_0001>

<llo_original>
// kernel: tpu_custom_call.1
$region0: #{tpu_custom_call.1}
  #allocation0 [shape = 'u32[]', space=smem, size = 0x4, offset = 0x4, fixed_abs, tag = 'smem constant byte address 0x4 - core index']
  #allocation1 [shape = 'u32[144,128]{1,0:T(1,128)}', space=vmem, size = 0x12000, scoped, tag = 'internal scratch']
  %s0 = inlined_call_operand.hbm [shape: f32[32,256], index: 0, kind: input, shape index: {}]
  %s1 = inlined_call_operand.vmem [shape: f32[32,1], index: 1, kind: input, shape index: {}]
  %s2 = inlined_call_operand.hbm [shape: f32[32,256], index: 2, kind: output, shape index: {}]
  %s3 = sld [smem:[#allocation0]]
  $region45: #{tpu_custom_call.1} parent=0
    _
  %s5 = ssub.s32 1, %s3
  %s6 = scalar_select 0, %s5, %s3
  $region1: #{tpu_custom_call.1} parent=0
    #allocation2 [shape = 'u8[16384]{0}', space=vmem, size = 0x4000, scoped, tag = 'input window, operand 0']
    #allocation3 [shape = 's32[2]{0}', space=sflag, size = 0x8, scoped, tag = 'scoped memory for tpu_custom_call.1']
    #allocation4 [shape = 's32[2]{0}', space=sflag, size = 0x8, scoped, tag = 'scoped memory for tpu_custom_call.1']
    #allocation5 [shape = 'u8[16384]{0}', space=vmem, size = 0x4000, scoped, tag = 'output window, operand 0']
    %7 = vsyncpa [#allocation3], 0
    %s8 = scalar_lea.sflag [#allocation3], 1
    %9 = vsyncpa %s8, 0
    %10 = vsyncpa [#allocation4], 0
    %s11 = scalar_lea.sflag [#allocation4], 1
    %12 = vsyncpa %s11, 0
    loop: start=0, step=1, limit=6
    $region2: #{tpu_custom_call.1} parent=1 // loop_pre_header
      _
    $region3: #{tpu_custom_call.1} parent=1 // loop_header
      %s14 = sphi 0, %s18
      %p15 = scmp.ge.s32.totalorder %s14, 6
      %s21 = sphi 0, %s33
      %s22 = sphi 0, %s29
      %s23 = sphi 0, %s21
      %s24 = sphi 0, %s22
      %s25 = sphi 0, %s23
      %s26 = sphi 0, %s24
      %s38 = sphi 0, %s40
      %s41 = sphi 0, %s38
      %s42 = sphi 0, %s41
      %s58 = sphi 0, %s42
      %s64 = sphi 0, %s66
      %s67 = sphi 0, %s64
      %s68 = sphi 0, %s67
      %s84 = sphi 0, %s68
      %s92 = sphi 0, %s94
      %s95 = sphi 0, %s92
      %s96 = sphi 0, %s95
      %s112 = sphi 0, %s96
    $region4: #{tpu_custom_call.1} parent=1 // loop_header_branch
      %17 = sbr.rel (%p15) target = $region8
    $region5: #{tpu_custom_call.1} parent=1 // loop_body
      %s19 = ssub.s32 %s14, 1
      %s20 = ssub.s32 %s14, 2
      %s27 = sadd.s32 1, %s22
      %p28 = scmp.ge.s32.totalorder %s27, 1
      %s29 = scalar_select %p28, 0, %s27
      %s30 = sadd.s32 1, %s21
      %s31 = scalar_select %p28, %s30, %s21
      %p32 = scmp.ge.s32.totalorder %s31, 4
      %s33 = scalar_select %p32, 0, %s31
      %s34 = ssub.s32 %s21, %s33
      %s35 = ssub.s32 %s22, %s29
      %s36 = sor.u32 %s34, %s35
      %p37 = scmp.eq.s32.totalorder %s36, 0
      %s39 = sadd.s32 %s38, 1
      %s40 = scalar_select %p37, %s38, %s39
      %p43 = pneg %p37
      %p44 = scmp.eq.s32.totalorder %s14, 3
      %p45 = por %p43, %p44
      %p46 = scmp.ne.s32.totalorder %s38, %s41
      %p47 = scmp.eq.s32.totalorder %s14, 0
      %p48 = por %p46, %p47
      %p49 = scmp.ne.s32.totalorder %s38, %s41
      %p50 = scmp.eq.s32.totalorder %s19, 3
      %p51 = por %p49, %p50
      %p52 = scmp.ne.s32.totalorder %s41, %s42
      %p53 = scmp.eq.s32.totalorder %s19, 0
      %p54 = por %p52, %p53
      %p55 = scmp.ne.s32.totalorder %s41, %s42
      %p56 = scmp.eq.s32.totalorder %s20, 3
      %p57 = por %p55, %p56
      %p59 = scmp.ne.s32.totalorder %s42, %s58
      %p60 = scmp.eq.s32.totalorder %s20, 0
      %p61 = por %p59, %p60
      %s62 = ssub.s32 %s21, %s33
      %p63 = scmp.eq.s32.totalorder %s62, 0
      %s65 = sadd.s32 %s64, 1
      %s66 = scalar_select %p63, %s64, %s65
      %p69 = pneg %p63
      %p70 = scmp.eq.s32.totalorder %s14, 3
      %p71 = por %p69, %p70
      %p72 = scmp.ne.s32.totalorder %s64, %s67
      %p73 = scmp.eq.s32.totalorder %s14, 0
      %p74 = por %p72, %p73
      %p75 = scmp.ne.s32.totalorder %s64, %s67
      %p76 = scmp.eq.s32.totalorder %s19, 3
      %p77 = por %p75, %p76
      %p78 = scmp.ne.s32.totalorder %s67, %s68
      %p79 = scmp.eq.s32.totalorder %s19, 0
      %p80 = por %p78, %p79
      %p81 = scmp.ne.s32.totalorder %s67, %s68
      %p82 = scmp.eq.s32.totalorder %s20, 3
      %p83 = por %p81, %p82
      %p85 = scmp.ne.s32.totalorder %s68, %s84
      %p86 = scmp.eq.s32.totalorder %s20, 0
      %p87 = por %p85, %p86
      %s88 = ssub.s32 %s21, %s33
      %s89 = ssub.s32 %s22, %s29
      %s90 = sor.u32 %s88, %s89
      %p91 = scmp.eq.s32.totalorder %s90, 0
      %s93 = sadd.s32 %s92, 1
      %s94 = scalar_select %p91, %s92, %s93
      %p97 = pneg %p91
      %p98 = scmp.eq.s32.totalorder %s14, 3
      %p99 = por %p97, %p98
      %p100 = scmp.ne.s32.totalorder %s92, %s95
      %p101 = scmp.eq.s32.totalorder %s14, 0
      %p102 = por %p100, %p101
      %p103 = scmp.ne.s32.totalorder %s92, %s95
      %p104 = scmp.eq.s32.totalorder %s19, 3
      %p105 = por %p103, %p104
      %p106 = scmp.ne.s32.totalorder %s95, %s96
      %p107 = scmp.eq.s32.totalorder %s19, 0
      %p108 = por %p106, %p107
      %p109 = scmp.ne.s32.totalorder %s95, %s96
      %p110 = scmp.eq.s32.totalorder %s20, 3
      %p111 = por %p109, %p110
      %p113 = scmp.ne.s32.totalorder %s96, %s112
      %p114 = scmp.eq.s32.totalorder %s20, 0
      %p115 = por %p113, %p114
      %p116 = scmp.le.s32.totalorder 1, %s14
      %p117 = scmp.lt.s32.totalorder %s14, 5
      %p118 = pnand %p116, %p117
      %p119 = pneg %p118
      // Predicated region
      $region9: #{tpu_custom_call.1} parent=5 // pred_check
        _
      $region10: #{tpu_custom_call.1} parent=5 // pred_check_branch
        %121 = sbr.rel (%p118) target = $region12
      $region11: #{tpu_custom_call.1} parent=5 // pred_region
        %s122 = ssub.s32 %s14, 1
      $region12: #{tpu_custom_call.1} parent=5 // pred_fallthru
        _
      %p123 = scmp.lt.s32.totalorder %s14, 4
      // Predicated region
      $region13: #{tpu_custom_call.1} parent=5 // pred_check
        %p124 = pneg %p123
      $region14: #{tpu_custom_call.1} parent=5 // pred_check_branch
        %126 = sbr.rel (%p124) target = $region16
      $region15: #{tpu_custom_call.1} parent=5 // pred_region
        // Predicated region
        $region17: #{tpu_custom_call.1} parent=15 // pred_check
          %p127 = pneg %p48
        $region18: #{tpu_custom_call.1} parent=15 // pred_check_branch
          %129 = sbr.rel (%p127) target = $region20
        $region19: #{tpu_custom_call.1} parent=15 // pred_region
          %s130 = sand.u32 %s38, 1
          %s131 = scalar_lea.sflag [#allocation3], %s130
          %s132 = sand.u32 %s38, 1
          %s133 = smul.addr %s132, 16
          %s134 = scalar_lea.vmem [#allocation2], %s133
          %s135 = smul.u32 2, %s22
          %s137 = ssub.s32 256, 256
          %138 = vsyncadd %s131, %s137
          %s139 = smul.addr %s21, 2
          %s140 = sadd.s32 %s135, %s139
          %s141 = smul.addr %s140, 128
          %s142 = scalar_lea.hbm %s0, %s141
          %s144 = sshll.u32 %s134, 4
          %s145 = int_to_ptr.vmem [resolvable:$true] %s144
          %147 = dma.hbm_to_vmem [thread:$0]  %s142, 256, %s145, %s131
        $region20: #{tpu_custom_call.1} parent=15 // pred_fallthru
          _
        // Predicated region
        $region21: #{tpu_custom_call.1} parent=15 // pred_check
          %p148 = pneg %p74
        $region22: #{tpu_custom_call.1} parent=15 // pred_check_branch
          %150 = sbr.rel (%p148) target = $region24
        $region23: #{tpu_custom_call.1} parent=15 // pred_region
          %p151 = scmp.lt.s32.totalorder %s21, 3
          %s152 = scalar_select %p151, %s21, 3
          %s153 = smul.addr %s152, 8
          %s154 = scalar_lea.vmem %s1, %s153
        $region24: #{tpu_custom_call.1} parent=15 // pred_fallthru
          _
      $region16: #{tpu_custom_call.1} parent=5 // pred_fallthru
        _
      %p155 = scmp.le.s32.totalorder 1, %s14
      %p156 = scmp.lt.s32.totalorder %s14, 5
      %p157 = pnand %p155, %p156
      %p158 = pneg %p157
      // Predicated region
      $region25: #{tpu_custom_call.1} parent=5 // pred_check
        _
      $region26: #{tpu_custom_call.1} parent=5 // pred_check_branch
        %160 = sbr.rel (%p157) target = $region28
      $region27: #{tpu_custom_call.1} parent=5 // pred_region
        %s161 = ssub.s32 %s14, 1
        %s162 = sand.u32 %s41, 1
        %s163 = scalar_lea.sflag [#allocation3], %s162
        %s164 = sand.u32 %s41, 1
        %s165 = smul.addr %s164, 16
        %s166 = scalar_lea.vmem [#allocation2], %s165
        // Predicated region
        $region29: #{tpu_custom_call.1} parent=27 // pred_check
          %p167 = pneg %p54
        $region30: #{tpu_custom_call.1} parent=27 // pred_check_branch
          %169 = sbr.rel (%p167) target = $region32
        $region31: #{tpu_custom_call.1} parent=27 // pred_region
          %170 = dma.done %s163, 256
        $region32: #{tpu_custom_call.1} parent=27 // pred_fallthru
          _
        %s171 = sand.u32 %s41, 1
        %s172 = scalar_lea.sflag [#allocation3], %s171
        %s173 = sand.u32 %s41, 1
        %s174 = smul.addr %s173, 16
        %s175 = scalar_lea.vmem [#allocation2], %s174
        %p176 = pneg %p54
        %p177 = pneg %p51
        %p178 = scmp.lt.s32.totalorder %s23, 3
        %s179 = scalar_select %p178, %s23, 3
        %s180 = smul.addr %s179, 8
        %s181 = scalar_lea.vmem %s1, %s180
        %p182 = pneg %p80
        %p183 = pneg %p77
        %p184 = pneg %p108
        %p185 = pneg %p105
        %s186 = sand.u32 %s95, 1
        %s187 = scalar_lea.sflag [#allocation4], %s186
        %s188 = sand.u32 %s95, 1
        %s189 = smul.addr %s188, 16
        %s190 = scalar_lea.vmem [#allocation5], %s189
        %s191 = smul.u32 2, %s24
        %p192 = scmp.lt.s32.totalorder %s23, 3
        %s193 = scalar_select %p192, %s23, 3
        %s194 = smul.addr %s193, 8
        %s195 = scalar_lea.vmem %s1, %s194
        %s196 = smul.u32 2, %s24
        %v197 = vld [vmem:[%s166] sm:$0xff]
        %v198 = vld [vmem:[%s166 + $0x8] sm:$0xff]
        %v199 = vld [vmem:[%s195] sm:$0xff]
        %vm200 = vcmp.ge.f32.partialorder %v197, 0.0
        %vm201 = vcmp.ge.f32.partialorder %v198, 0.0
        %203 = vset.pattern.permute.xlu0 0
        %204 = vperm.xlu0 %203, %v199
        %v205 = vpop.permute.xlu0 %204
        %v207 = vmul.f32 %v197, %v205
        %v208 = vmul.f32 %v198, %v205
        %v209 = vsel %vm200, %v197, %v207
        %v210 = vsel %vm201, %v198, %v208
        %211 = vst [vmem:[%s190] sm:$0xff] %v209
        %212 = vst [vmem:[%s190 + $0x8] sm:$0xff] %v210
        %s213 = sand.u32 %s95, 1
        %s214 = scalar_lea.sflag [#allocation4], %s213
        %s215 = sand.u32 %s95, 1
        %s216 = smul.addr %s215, 16
        %s217 = scalar_lea.vmem [#allocation5], %s216
        // Predicated region
        $region33: #{tpu_custom_call.1} parent=27 // pred_check
          %p218 = pneg %p105
        $region34: #{tpu_custom_call.1} parent=27 // pred_check_branch
          %220 = sbr.rel (%p218) target = $region36
        $region35: #{tpu_custom_call.1} parent=27 // pred_region
          %s221 = smul.u32 2, %s24
          %s223 = ssub.s32 256, 256
          %224 = vsyncadd %s214, %s223
          %s225 = smul.addr %s23, 2
          %s226 = sadd.s32 %s221, %s225
          %s227 = smul.addr %s226, 128
          %s228 = scalar_lea.hbm %s2, %s227
          %s230 = sshll.u32 %s217, 4
          %s231 = int_to_ptr.vmem [resolvable:$true] %s230
          %233 = dma.vmem_to_hbm [thread:$0]  %s231, 256, %s228, %s214
        $region36: #{tpu_custom_call.1} parent=27 // pred_fallthru
          _
      $region28: #{tpu_custom_call.1} parent=5 // pred_fallthru
        _
      %p234 = scmp.le.s32.totalorder 2, %s14
      // Predicated region
      $region37: #{tpu_custom_call.1} parent=5 // pred_check
        %p235 = pneg %p234
      $region38: #{tpu_custom_call.1} parent=5 // pred_check_branch
        %237 = sbr.rel (%p235) target = $region40
      $region39: #{tpu_custom_call.1} parent=5 // pred_region
        %s238 = ssub.s32 %s14, 2
        // Predicated region
        $region41: #{tpu_custom_call.1} parent=39 // pred_check
          %p239 = pneg %p111
        $region42: #{tpu_custom_call.1} parent=39 // pred_check_branch
          %241 = sbr.rel (%p239) target = $region44
        $region43: #{tpu_custom_call.1} parent=39 // pred_region
          %s242 = sand.u32 %s96, 1
          %s243 = scalar_lea.sflag [#allocation4], %s242
          %s244 = sand.u32 %s96, 1
          %s245 = smul.addr %s244, 16
          %s246 = scalar_lea.vmem [#allocation5], %s245
          %247 = dma.done %s243, 256
        $region44: #{tpu_custom_call.1} parent=39 // pred_fallthru
          _
      $region40: #{tpu_custom_call.1} parent=5 // pred_fallthru
        _
    $region6: #{tpu_custom_call.1} parent=1 // loop_footer
      %s18 = sadd.s32 1, %s14
    $region7: #{tpu_custom_call.1} parent=1 // loop_footer_branch
      %13 = sbr.rel target = $region3
    $region8: #{tpu_custom_call.1} parent=1 // loop_exit
      _
    %248 = vsyncpa [#allocation3], 1
    %s249 = scalar_lea.sflag [#allocation3], 1
    %250 = vsyncpa %s249, 1
    %251 = vsyncpa [#allocation4], 1
    %s252 = scalar_lea.sflag [#allocation4], 1
    %253 = vsyncpa %s252, 1

</llo_original>
